<compile_context>
chip_gen: v5e
topology: v5e:2x2
jax: 0.10.0
libtpu: 0.0.40
codegen_flags: <defaults>
</compile_context>

<pallas_src>
import functools
import numpy as np
import jax
import jax.numpy as jnp
from jax.experimental import pallas as pl
from jax.experimental.pallas import tpu as pltpu

CAT_NUM = 4


def _round_up(x, m):
    return ((x + m - 1) // m) * m


_DEVICE_KIND = None


def _device_kind():
    global _DEVICE_KIND
    if _DEVICE_KIND is None:
        try:
            _DEVICE_KIND = jax.devices()[0].device_kind.lower()
        except Exception:
            _DEVICE_KIND = "unknown"
    return _DEVICE_KIND


def _lane_tile():
    """256-wide N tiles on v6e/v7x (2x256x256 MXU), 128 elsewhere (incl. v5e)."""
    kind = _device_kind()
    return 256 if ("v6" in kind or "v7" in kind) else 128


def _vmem_limit():
    """Generation-aware scoped-VMEM limit: v5e/v6e have 128 MiB physical
    (use up to 96), v7x only 64 MiB per TensorCore (stay <= 48)."""
    kind = _device_kind()
    if "v7" in kind:
        return 48 * 1024 * 1024
    if "v5" in kind or "v6" in kind:
        return 96 * 1024 * 1024
    return 32 * 1024 * 1024


def _compiler_params(sem):
    return pltpu.CompilerParams(dimension_semantics=sem,
                                vmem_limit_bytes=_vmem_limit())


def _choose_tk(K):
    """Tiny K -> full extent padded to a multiple of 32 (clean bf16 packing);
    otherwise the largest multiple-of-128 divisor of K up to 2048; else pad."""
    if K <= 256:
        Kp = _round_up(K, 32)
        return Kp, Kp
    if K % 128 == 0:
        for tk in range(2048, 127, -128):
            if K % tk == 0:
                return tk, K
    Kp = _round_up(K, 128)
    for tk in range(min(Kp, 2048), 127, -128):
        if Kp % tk == 0:
            return tk, Kp
    return 128, Kp


def _choose_tm(M):
    """Prefer an exact divisor of M (no row padding -> no post-kernel slice)."""
    for tm in (256, 128, 64, 32, 16, 8):
        if M % tm == 0:
            return tm, M
    tm = 128 if M >= 128 else _round_up(max(M, 1), 8)
    return tm, _round_up(M, tm)


# ----------------------------- Pallas kernels -------------------------------

def _matmul_bias_kernel(a_ref, b_ref, bias_ref, o_ref, acc_ref, *, relu):
    @pl.when(pl.program_id(2) == 0)
    def _():
        acc_ref[...] = jnp.zeros_like(acc_ref)

    acc_ref[...] += jnp.dot(a_ref[...], b_ref[...],
                            preferred_element_type=jnp.float32)

    @pl.when(pl.program_id(2) == pl.num_programs(2) - 1)
    def _():
        r = acc_ref[...] + bias_ref[...]
        if relu:
            r = jnp.maximum(r, 0.0)
        o_ref[...] = r.astype(o_ref.dtype)


def prep_matmul(w_mat, b):
    """One-time weight prep: bf16 [Kp, Np] + f32 bias [1, Np] + K tile size."""
    K, N = w_mat.shape
    Np = _round_up(N, 128)
    tk, Kp = _choose_tk(K)
    w_p = jnp.zeros((Kp, Np), jnp.bfloat16).at[:K, :N].set(w_mat.astype(jnp.bfloat16))
    b_p = jnp.zeros((1, Np), jnp.float32).at[0, :N].set(b.astype(jnp.float32))
    return {"w": w_p, "b": b_p, "k": K, "n": N, "kp": Kp, "np": Np, "tk": tk}


def pallas_matmul_prepped(a, prep, relu=False, out_dtype=jnp.float32):
    """relu(a @ W + b): bf16 MXU operands, f32 accumulation, output written in
    out_dtype (bf16 for activations, f32 for logits)."""
    M, K = a.shape
    assert K == prep["k"]
    Kp, Np, tk, N = prep["kp"], prep["np"], prep["tk"], prep["n"]

    lane = _lane_tile()
    tn = lane if Np % lane == 0 else 128
    tm, Mp = _choose_tm(M)
    # Expose >= 2 blocks on a parallel axis so both v7x TensorCores get work.
    if (Mp // tm) * (Np // tn) == 1:
        if Np >= 256:
            tn = 128
        elif tm >= 16:
            tm //= 2

    a_b = a.astype(jnp.bfloat16)
    if (Mp, Kp) != (M, K):
        a_b = jnp.zeros((Mp, Kp), jnp.bfloat16).at[:M, :K].set(a_b)

    grid = (Mp // tm, Np // tn, Kp // tk)
    out = pl.pallas_call(
        functools.partial(_matmul_bias_kernel, relu=relu),
        out_shape=jax.ShapeDtypeStruct((Mp, Np), out_dtype),
        grid_spec=pltpu.PrefetchScalarGridSpec(
            num_scalar_prefetch=0,
            grid=grid,
            in_specs=[
                pl.BlockSpec((tm, tk), lambda i, j, k: (i, k)),
                pl.BlockSpec((tk, tn), lambda i, j, k: (k, j)),
                pl.BlockSpec((1, tn), lambda i, j, k: (0, j)),
            ],
            out_specs=pl.BlockSpec((tm, tn), lambda i, j, k: (i, j)),
            scratch_shapes=[pltpu.VMEM((tm, tn), jnp.float32)],
        ),
        compiler_params=_compiler_params(("parallel", "parallel", "arbitrary")),
    )(a_b, prep["w"], prep["b"])
    if (Mp, Np) != (M, N):
        # TODO(synk): this slice is an extra XLA pass; it only triggers for the
        # tiny FC-style matmuls (M < 8 or N not a multiple of 128).
        out = out[:M, :N]
    return out


def _gap_kernel(x_ref, o_ref, *, inv_hw):
    @pl.when(pl.program_id(1) == 0)
    def _():
        o_ref[...] = jnp.zeros_like(o_ref)

    o_ref[...] += jnp.sum(x_ref[...].astype(jnp.float32), axis=1)

    @pl.when(pl.program_id(1) == pl.num_programs(1) - 1)
    def _():
        o_ref[...] = o_ref[...] * inv_hw


def _largest_divisor(n, mult, cap):
    best = None
    for d in range(mult, min(n, cap) + 1, mult):
        if n % d == 0:
            best = d
    return best


def pallas_global_avg_pool(x):
    """x: [B, HW, C] -> [B, C] mean over HW (tiled 'arbitrary' reduction)."""
    B, HW, C = x.shape
    tc = C
    for cand in (2048, 1024, 512, 256, 128):
        if C % cand == 0:
            tc = cand
            break
    itemsize = jnp.dtype(x.dtype).itemsize
    budget = 8 * 1024 * 1024 if "v7" in _device_kind() else 16 * 1024 * 1024
    t_hw = HW
    if HW % 8 == 0:
        cap = max(8, budget // max(1, B * tc * itemsize))
        d = _largest_divisor(HW, 8, min(cap, 4096))
        if d is not None:
            t_hw = d
    grid = (C // tc, HW // t_hw)
    return pl.pallas_call(
        functools.partial(_gap_kernel, inv_hw=1.0 / HW),
        out_shape=jax.ShapeDtypeStruct((B, C), jnp.float32),
        grid_spec=pltpu.PrefetchScalarGridSpec(
            num_scalar_prefetch=0,
            grid=grid,
            in_specs=[pl.BlockSpec((B, t_hw, tc), lambda ci, hi: (0, hi, ci))],
            out_specs=pl.BlockSpec((B, tc), lambda ci, hi: (0, ci)),
        ),
        compiler_params=_compiler_params(("parallel", "arbitrary")),
    )(x)


def _conv3x3_s1_kernel(x0_ref, x1_ref, x2_ref, w_ref, b_ref, o_ref, *, wo, relu):
    acc = jnp.zeros((wo, o_ref.shape[-1]), jnp.float32)
    for dy, xr in enumerate((x0_ref, x1_ref, x2_ref)):
        row = xr[0, 0]                                   # [Wp, Cin] bf16
        for dx in range(3):
            acc += jnp.dot(row[dx:dx + wo, :], w_ref[dy, dx],
                           preferred_element_type=jnp.float32)
    r = acc + b_ref[...]
    if relu:
        r = jnp.maximum(r, 0.0)
    o_ref[0, 0] = r.astype(o_ref.dtype)


def conv3x3_s1_fused(x, prep, pad, relu):
    """3x3 stride-1 conv, NHWC, with NO im2col materialization: the kh taps are
    three row-shifted BlockSpec views of the same padded activation and the kw
    taps are static in-kernel slices feeding the MXU directly."""
    B, H, W, Cin = x.shape
    Cout = prep["n"]
    xb = x.astype(jnp.bfloat16)
    if pad:
        xb = jnp.pad(xb, ((0, 0), (pad, pad), (pad, pad), (0, 0)))
    Hp, Wp = H + 2 * pad, W + 2 * pad
    Ho, Wo = Hp - 2, Wp - 2
    t_co = 128
    n_co = Cout // t_co

    def xspec(dy):
        def imap(b, ho, co):
            return (b, ho + dy, 0, 0)
        return pl.BlockSpec((1, 1, Wp, Cin), imap)

    return pl.pallas_call(
        functools.partial(_conv3x3_s1_kernel, wo=Wo, relu=relu),
        out_shape=jax.ShapeDtypeStruct((B, Ho, Wo, Cout), jnp.bfloat16),
        grid_spec=pltpu.PrefetchScalarGridSpec(
            num_scalar_prefetch=0,
            grid=(B, Ho, n_co),
            in_specs=[
                xspec(0), xspec(1), xspec(2),
                pl.BlockSpec((3, 3, Cin, t_co), lambda b, ho, co: (0, 0, 0, co)),
                pl.BlockSpec((1, t_co), lambda b, ho, co: (0, co)),
            ],
            out_specs=pl.BlockSpec((1, 1, Wo, t_co), lambda b, ho, co: (b, ho, 0, co)),
        ),
        compiler_params=_compiler_params(("parallel", "parallel", "parallel")),
    )(xb, xb, xb, prep["w4"], prep["b"])


# ----------------------------- conv glue (NHWC) ------------------------------

def conv2d_nhwc(x, prep, stride, pad, relu):
    """x: [B,H,W,Cin] -> [B,Ho,Wo,Cout] bf16."""
    B, H, W, Cin = x.shape
    kh, kw = prep["kh"], prep["kw"]
    if (stride == 1 and kh == 3 and kw == 3 and "w4" in prep
            and prep["n"] % 128 == 0 and prep["np"] == prep["n"]):
        return conv3x3_s1_fused(x, prep, pad=pad, relu=relu)

    xb = x.astype(jnp.bfloat16)
    if pad:
        xb = jnp.pad(xb, ((0, 0), (pad, pad), (pad, pad), (0, 0)))
    Ho = (H + 2 * pad - kh) // stride + 1
    Wo = (W + 2 * pad - kw) // stride + 1
    if kh == 1 and kw == 1 and stride == 1:
        patches = xb.reshape(B * Ho * Wo, Cin)
    else:
        # TODO(synk): strided convs (stem s=4, down2/3 s=2) still materialize
        # bf16 im2col patches in HBM; only the stride-1 3x3 conv is fully fused.
        cols = [xb[:, i:i + stride * Ho:stride, j:j + stride * Wo:stride, :]
                for i in range(kh) for j in range(kw)]
        patches = jnp.stack(cols, axis=3).reshape(B * Ho * Wo, kh * kw * Cin)
    out = pallas_matmul_prepped(patches, prep, relu=relu, out_dtype=jnp.bfloat16)
    return out.reshape(B, Ho, Wo, prep["n"])


# ----------------------------- model pieces ---------------------------------

def backbone_forward(pp, x_nchw):
    """Stub pretrained_model: (logits[B,200], rpn_feature[B,h,w,2048] NHWC, feature[B,2048])."""
    x_nhwc = jnp.transpose(x_nchw, (0, 2, 3, 1))            # 3 channels: cheap
    feat = conv2d_nhwc(x_nhwc, pp["stem"], stride=4, pad=1, relu=True)   # bf16
    B, Ho, Wo, C = feat.shape
    # TODO(synk): GAP re-reads the stem output; emitting per-block column sums
    # from the stem matmul itself would save this read pass.
    feature = pallas_global_avg_pool(feat.reshape(B, Ho * Wo, C))        # f32
    resnet_out = pallas_matmul_prepped(feature, pp["fc"])                # f32 logits
    return resnet_out, feat, feature


def proposal_net_forward(pp, rpn_nhwc):
    B = rpn_nhwc.shape[0]
    d1 = conv2d_nhwc(rpn_nhwc, pp["down1"], stride=1, pad=1, relu=True)  # fused
    d2 = conv2d_nhwc(d1, pp["down2"], stride=2, pad=1, relu=True)
    d3 = conv2d_nhwc(d2, pp["down3"], stride=2, pad=1, relu=True)

    # Merged tidy 1x1 convs: one Pallas matmul over all three levels' rows.
    f1 = d1.reshape(-1, 128)
    f2 = d2.reshape(-1, 128)
    f3 = d3.reshape(-1, 128)
    allf = jnp.concatenate([f1, f2, f3], axis=0)
    out = pallas_matmul_prepped(allf, pp["tidy_all"], relu=False)        # [*, 21] f32
    n1, n2 = f1.shape[0], f2.shape[0]

    def flat(o, H, W, A):
        # match PyTorch's [B, A, H, W].view(B, -1) flatten order
        return o.reshape(B, H, W, A).transpose(0, 3, 1, 2).reshape(B, -1)

    t1 = flat(out[:n1, 0:6], d1.shape[1], d1.shape[2], 6)
    t2 = flat(out[n1:n1 + n2, 6:12], d2.shape[1], d2.shape[2], 6)
    t3 = flat(out[n1 + n2:, 12:21], d3.shape[1], d3.shape[2], 9)
    return jnp.concatenate([t1, t2, t3], axis=1)


# -------------------- host-side NMS / crop-resize helpers --------------------

def hard_nms(cdds, topn=10, iou_thresh=0.25):
    """cdds: [N, 6] numpy, columns (score, y0, x0, y1, x1, index)."""
    cdds = cdds.copy()
    cdds = cdds[np.argsort(cdds[:, 0])]
    cdd_results = []
    res = cdds
    while len(res) > 0:
        cdd = res[-1]
        cdd_results.append(cdd)
        if len(cdd_results) == topn:
            break
        res = res[:-1]
        start_max = np.maximum(res[:, 1:3], cdd[1:3])
        end_min = np.minimum(res[:, 3:5], cdd[3:5])
        lengths = end_min - start_max
        intersec = lengths[:, 0] * lengths[:, 1]
        intersec[np.logical_or(lengths[:, 0] < 0, lengths[:, 1] < 0)] = 0
        area_res = (res[:, 3] - res[:, 1]) * (res[:, 4] - res[:, 2])
        area_cdd = (cdd[3] - cdd[1]) * (cdd[4] - cdd[2])
        # epsilon guards 0/0 NaN for degenerate boxes; identical for valid boxes
        iou = intersec / (area_res + area_cdd - intersec + 1e-12)
        res = res[iou < iou_thresh]
    while len(cdd_results) < topn:
        cdd_results.append(cdd_results[-1])
    return np.array(cdd_results)


def _crop_resize_matrix(lo, hi, out_size, full_size):
    """align_corners=True bilinear sampling matrix [out_size, full_size] whose
    nonzeros cover the crop [lo, hi).  Degenerate/inverted crops clamp to 1px."""
    lo = int(np.clip(lo, 0, full_size - 1))
    hi = int(np.clip(hi, lo + 1, full_size))
    in_size = hi - lo
    if out_size > 1 and in_size > 1:
        src = np.arange(out_size, dtype=np.float64) * ((in_size - 1) / (out_size - 1))
    else:
        src = np.zeros((out_size,), np.float64)
    l = np.floor(src).astype(np.int64)
    h = np.minimum(l + 1, in_size - 1)
    frac = (src - l).astype(np.float32)
    m = np.zeros((out_size, full_size), np.float32)
    rows = np.arange(out_size)
    np.add.at(m, (rows, lo + l), 1.0 - frac)
    np.add.at(m, (rows, lo + h), frac)
    return m


def generate_synthetic_anchor_maps(level_shapes, level_num_anchors, img_size):
    """Deterministic anchors ordered to match ProposalNet flatten (per level: anchor, y, x)."""
    anchors = []
    for (H, W), A in zip(level_shapes, level_num_anchors):
        stride_y = img_size / H
        stride_x = img_size / W
        base = 1.5 * max(stride_y, stride_x)
        for a in range(A):
            size = base * (0.75 + 0.25 * a)
            for yy in range(H):
                for xx in range(W):
                    cy = (yy + 0.5) * stride_y
                    cx = (xx + 0.5) * stride_x
                    anchors.append([cy - size / 2, cx - size / 2,
                                    cy + size / 2, cx + size / 2])
    return np.array(anchors, dtype=np.float64)


# ----------------------------- parameters -----------------------------------

def init_params(key):
    ks = jax.random.split(key, 16)

    def conv_w(k, cout, cin, kh, kw):
        return jax.random.normal(k, (cout, cin, kh, kw), jnp.float32) / np.sqrt(cin * kh * kw)

    def lin_w(k, din, dout):
        return jax.random.normal(k, (din, dout), jnp.float32) / np.sqrt(din)

    z = lambda n: jnp.zeros((n,), jnp.float32)
    return {
        "stem_w": conv_w(ks[0], 2048, 3, 3, 3), "stem_b": z(2048),
        "fc_w": lin_w(ks[1], 2048, 200), "fc_b": z(200),
        "down1_w": conv_w(ks[2], 128, 2048, 3, 3), "down1_b": z(128),
        "down2_w": conv_w(ks[3], 128, 128, 3, 3), "down2_b": z(128),
        "down3_w": conv_w(ks[4], 128, 128, 3, 3), "down3_b": z(128),
        "tidy1_w": conv_w(ks[5], 6, 128, 1, 1), "tidy1_b": z(6),
        "tidy2_w": conv_w(ks[6], 6, 128, 1, 1), "tidy2_b": z(6),
        "tidy3_w": conv_w(ks[7], 9, 128, 1, 1), "tidy3_b": z(9),
        "concat_w": lin_w(ks[8], 2048 * (CAT_NUM + 1), 200), "concat_b": z(200),
        "partcls_w": lin_w(ks[9], 2048, 200), "partcls_b": z(200),
    }


def prepare_params(raw):
    """One-time: transpose conv weights, cast bf16, pad, pack bias."""

    def conv_prep(w, b):
        Cout, Cin, kh, kw = w.shape
        w4 = jnp.transpose(w, (2, 3, 1, 0))                 # [kh, kw, Cin, Cout]
        w_mat = w4.reshape(kh * kw * Cin, Cout)
        p = prep_matmul(w_mat, b)
        p["kh"], p["kw"] = kh, kw
        if kh == 3 and kw == 3 and Cout % 128 == 0:
            p["w4"] = w4.astype(jnp.bfloat16)               # fused 3x3 path weights
        return p

    pp = {
        "stem": conv_prep(raw["stem_w"], raw["stem_b"]),
        "fc": prep_matmul(raw["fc_w"], raw["fc_b"]),
        "down1": conv_prep(raw["down1_w"], raw["down1_b"]),
        "down2": conv_prep(raw["down2_w"], raw["down2_b"]),
        "down3": conv_prep(raw["down3_w"], raw["down3_b"]),
        "concat": prep_matmul(raw["concat_w"], raw["concat_b"]),
        "partcls": prep_matmul(raw["partcls_w"], raw["partcls_b"]),
    }
    tw = jnp.concatenate([raw["tidy1_w"].reshape(6, 128).T,
                          raw["tidy2_w"].reshape(6, 128).T,
                          raw["tidy3_w"].reshape(9, 128).T], axis=1)   # [128, 21]
    tb = jnp.concatenate([raw["tidy1_b"], raw["tidy2_b"], raw["tidy3_b"]])
    pp["tidy_all"] = prep_matmul(tw, tb)
    return pp


# ----------------------------- attention_net forward ------------------------

def attention_net_forward(pp, x, edge_anchors, topN=4, pad_side=8, resize=32):
    resnet_out, rpn_feature, feature = backbone_forward(pp, x)
    x_pad = jnp.pad(x, ((0, 0), (0, 0), (pad_side, pad_side), (pad_side, pad_side)))
    batch = x.shape[0]

    rpn_score = proposal_net_forward(pp, rpn_feature)       # [B, num_anchors] f32

    # host-side NMS (matches .data.cpu().numpy() round-trip in the original)
    rpn_np = np.asarray(jax.device_get(rpn_score))
    all_cdds = [
        np.concatenate((s.reshape(-1, 1), edge_anchors.copy(),
                        np.arange(0, len(s)).reshape(-1, 1)), axis=1)
        for s in rpn_np
    ]
    top_n_cdds = np.array([hard_nms(c, topn=topN, iou_thresh=0.25) for c in all_cdds])
    top_n_index = top_n_cdds[:, :, -1].astype(np.int64)
    top_n_index_j = jnp.asarray(top_n_index, dtype=jnp.int32)
    top_n_prob = jnp.take_along_axis(rpn_score, top_n_index_j, axis=1)

    # Batched crop + bilinear resize (align_corners=True): crop boxes are baked
    # into fixed-shape interpolation matrices, so one einsum handles all crops
    # with no per-crop-size retracing.
    # TODO(synk): the crop/resize itself runs in XLA (batched einsum), not Pallas.
    Hp, Wp = x_pad.shape[2], x_pad.shape[3]
    Mh = np.zeros((batch, topN, resize, Hp), np.float32)
    Mw = np.zeros((batch, topN, resize, Wp), np.float32)
    for i in range(batch):
        for j in range(topN):
            y0, x0, y1, x1 = [int(v) for v in top_n_cdds[i, j, 1:5]]
            Mh[i, j] = _crop_resize_matrix(y0, y1, resize, Hp)
            Mw[i, j] = _crop_resize_matrix(x0, x1, resize, Wp)
    part_imgs = jnp.einsum("bjoh,bchw,bjpw->bjcop",
                           jnp.asarray(Mh), x_pad, jnp.asarray(Mw))
    part_imgs = part_imgs.reshape(batch * topN, 3, resize, resize)

    _, _, part_features = backbone_forward(pp, part_imgs)   # [B*topN, 2048]
    part_feature = part_features.reshape(batch, topN, -1)[:, :CAT_NUM]
    part_feature = part_feature.reshape(batch, -1)

    concat_out = jnp.concatenate([part_feature, feature], axis=1)
    concat_logits = pallas_matmul_prepped(concat_out, pp["concat"])
    raw_logits = resnet_out
    part_logits = pallas_matmul_prepped(part_features, pp["partcls"]).reshape(batch, topN, -1)
    return [raw_logits, concat_logits, part_logits, top_n_index_j, top_n_prob]


# ----------------------------- main ------------------------------------------

if __name__ == "__main__":
    key = jax.random.PRNGKey(0)
    pkey, xkey = jax.random.split(key)
    raw_params = init_params(pkey)
    params = prepare_params(raw_params)

    B, IMG = 2, 32                         # small stand-in for 448x448 input
    PAD_SIDE = 8                           # scaled stand-in for pad_side=224
    x = jax.random.normal(xkey, (B, 3, IMG, IMG), jnp.float32)

    # ProposalNet pyramid spatial sizes for this backbone (stride-4 stem on 32x32):
    # d1: 8x8 (6 anchors/cell), d2: 4x4 (6), d3: 2x2 (9)  -> 516 anchors total
    edge_anchors = generate_synthetic_anchor_maps(
        level_shapes=[(8, 8), (4, 4), (2, 2)], level_num_anchors=[6, 6, 9], img_size=IMG)
    edge_anchors = np.clip((edge_anchors + PAD_SIDE).astype(np.int64),
                           0, IMG + 2 * PAD_SIDE).astype(np.float64)

    outs = attention_net_forward(params, x, edge_anchors,
                                 topN=4, pad_side=PAD_SIDE, resize=IMG)
    for o in outs:
        jax.block_until_ready(o)

    raw_logits, concat_logits, part_logits, top_n_index, top_n_prob = outs
    assert raw_logits.shape == (B, 200)
    assert concat_logits.shape == (B, 200)
    assert part_logits.shape == (B, 4, 200)
    assert top_n_index.shape == (B, 4)
    assert top_n_prob.shape == (B, 4)
    assert not bool(jnp.isnan(concat_logits).any())
    print("KERNEL_OK")
</pallas_src>

<mosaic_0001>
module attributes {stable_mosaic.version = 11 : i64} {
  func.func @_matmul_bias_kernel(%arg0: i32, %arg1: i32, %arg2: i32, %arg3: memref<128x32xbf16, #tpu.memory_space<vmem>>, %arg4: memref<32x128xbf16, #tpu.memory_space<vmem>>, %arg5: memref<1x128xf32, #tpu.memory_space<vmem>>, %arg6: memref<128x128xbf16, #tpu.memory_space<vmem>>, %arg7: memref<128x128xf32, #tpu.memory_space<vmem>>) attributes {dimension_semantics = [#tpu.dimension_semantics<parallel>, #tpu.dimension_semantics<parallel>, #tpu.dimension_semantics<arbitrary>], iteration_bounds = array<i64: 1, 16, 1>, scalar_prefetch = 0 : i64, scratch_operands = 1 : i64, tpu.core_type = #tpu.core_type<tc>, window_params = [{transform_indices = @transform_0, window_bounds = array<i64: 128, 32>}, {transform_indices = @transform_1, window_bounds = array<i64: 32, 128>}, {transform_indices = @transform_2, window_bounds = array<i64: 1, 128>}, {transform_indices = @transform_3, window_bounds = array<i64: 128, 128>}]} {
    %c0_i32 = arith.constant 0 : i32
    %0 = arith.cmpi eq, %arg2, %c0_i32 : i32
    %1 = arith.extui %0 : i1 to i32
    %c0_i32_0 = arith.constant 0 : i32
    %2 = arith.cmpi ne, %1, %c0_i32_0 : i32
    scf.if %2 {
      %cst_10 = arith.constant 0.000000e+00 : f32
      %12 = vector.broadcast %cst_10 : f32 to vector<128x128xf32>
      %c0_11 = arith.constant 0 : index
      %c0_12 = arith.constant 0 : index
      %13 = vector.load %arg7[%c0_11, %c0_12] : memref<128x128xf32, #tpu.memory_space<vmem>>, vector<128x128xf32>
      tpu.vector_store %arg7[%c0_11, %c0_12], %12 {strides = array<i32>} : memref<128x128xf32, #tpu.memory_space<vmem>>, vector<128x128xf32>,
    } else {
    }
    %c0 = arith.constant 0 : index
    %c0_1 = arith.constant 0 : index
    %3 = vector.load %arg7[%c0, %c0_1] : memref<128x128xf32, #tpu.memory_space<vmem>>, vector<128x128xf32>
    %c0_2 = arith.constant 0 : index
    %c0_3 = arith.constant 0 : index
    %4 = vector.load %arg3[%c0_2, %c0_3] : memref<128x32xbf16, #tpu.memory_space<vmem>>, vector<128x32xbf16>
    %c0_4 = arith.constant 0 : index
    %c0_5 = arith.constant 0 : index
    %5 = vector.load %arg4[%c0_4, %c0_5] : memref<32x128xbf16, #tpu.memory_space<vmem>>, vector<32x128xbf16>
    %cst = arith.constant dense<0.000000e+00> : vector<128x128xf32>
    %6 = tpu.matmul %4, %5, %cst {dimension_numbers = #tpu.dot_dimension_numbers<[1], [0], [0], [1], [0, 0, 1, 1], [], []>} : vector<128x32xbf16>, vector<32x128xbf16>, vector<128x128xf32> -> vector<128x128xf32>
    %7 = arith.addf %3, %6 : vector<128x128xf32>
    %c0_6 = arith.constant 0 : index
    %c0_7 = arith.constant 0 : index
    %8 = vector.load %arg7[%c0_6, %c0_7] : memref<128x128xf32, #tpu.memory_space<vmem>>, vector<128x128xf32>
    tpu.vector_store %arg7[%c0_6, %c0_7], %7 {strides = array<i32>} : memref<128x128xf32, #tpu.memory_space<vmem>>, vector<128x128xf32>,
    %c0_i32_8 = arith.constant 0 : i32
    %9 = arith.cmpi eq, %arg2, %c0_i32_8 : i32
    %10 = arith.extui %9 : i1 to i32
    %c0_i32_9 = arith.constant 0 : i32
    %11 = arith.cmpi ne, %10, %c0_i32_9 : i32
    scf.if %11 {
      %c0_10 = arith.constant 0 : index
      %c0_11 = arith.constant 0 : index
      %12 = vector.load %arg7[%c0_10, %c0_11] : memref<128x128xf32, #tpu.memory_space<vmem>>, vector<128x128xf32>
      %c0_12 = arith.constant 0 : index
      %c0_13 = arith.constant 0 : index
      %13 = vector.load %arg5[%c0_12, %c0_13] : memref<1x128xf32, #tpu.memory_space<vmem>>, vector<1x128xf32>
      %14 = vector.broadcast %13 : vector<1x128xf32> to vector<128x128xf32>
      %15 = arith.addf %12, %14 : vector<128x128xf32>
      %cst_14 = arith.constant 0.000000e+00 : f32
      %16 = vector.broadcast %cst_14 : f32 to vector<128x128xf32>
      %17 = arith.maximumf %15, %16 : vector<128x128xf32>
      %18 = arith.truncf %17 : vector<128x128xf32> to vector<128x128xbf16>
      %c0_15 = arith.constant 0 : index
      %c0_16 = arith.constant 0 : index
      %19 = vector.load %arg6[%c0_15, %c0_16] : memref<128x128xbf16, #tpu.memory_space<vmem>>, vector<128x128xbf16>
      tpu.vector_store %arg6[%c0_15, %c0_16], %18 {strides = array<i32>} : memref<128x128xbf16, #tpu.memory_space<vmem>>, vector<128x128xbf16>,
    } else {
    }
    return
  }
  func.func @transform_0(%arg0: i32, %arg1: i32, %arg2: i32) -> (i32, i32) {
    %c0_i32 = arith.constant 0 : i32
    return %arg0, %arg2 : i32, i32
  }
  func.func @transform_1(%arg0: i32, %arg1: i32, %arg2: i32) -> (i32, i32) {
    %c0_i32 = arith.constant 0 : i32
    return %arg2, %arg1 : i32, i32
  }
  func.func @transform_2(%arg0: i32, %arg1: i32, %arg2: i32) -> (i32, i32) {
    %c0_i32 = arith.constant 0 : i32
    %c0_i32_0 = arith.constant 0 : i32
    return %c0_i32, %arg1 : i32, i32
  }
  func.func @transform_3(%arg0: i32, %arg1: i32, %arg2: i32) -> (i32, i32) {
    %c0_i32 = arith.constant 0 : i32
    return %arg0, %arg1 : i32, i32
  }
}

</mosaic_0001>

<llo_original>
// kernel: tpu_custom_call.1
$region0: #{tpu_custom_call.1}
  #allocation0 [shape = 'u32[]', space=smem, size = 0x4, offset = 0x4, fixed_abs, tag = 'smem constant byte address 0x4 - core index']
  #allocation1 [shape = 'u32[72,128]{1,0:T(1,128)}', space=vmem, size = 0x9000, scoped, tag = 'internal scratch']
  #allocation2 [shape = 'f32[128,128]{1,0:T(8,128)}', space=vmem, size = 0x10000, scoped, tag = 'scratch operand']
  %s0 = inlined_call_operand.vmem [shape: bf16[128,32], index: 0, kind: input, shape index: {}]
  %s1 = inlined_call_operand.hbm [shape: bf16[32,2048], index: 1, kind: input, shape index: {}]
  %s2 = inlined_call_operand.vmem [shape: f32[1,2048], index: 2, kind: input, shape index: {}]
  %s3 = inlined_call_operand.hbm [shape: bf16[128,2048], index: 3, kind: output, shape index: {}]
  %s4 = sld [smem:[#allocation0]]
  $region57: #{tpu_custom_call.1} parent=0
    _
  %s6 = ssub.s32 1, %s4
  %s7 = scalar_select 0, %s6, %s4
  $region1: #{tpu_custom_call.1} parent=0
    #allocation3 [shape = 'u8[16384]{0}', space=vmem, size = 0x4000, scoped, tag = 'input window, operand 1']
    #allocation4 [shape = 's32[2]{0}', space=sflag, size = 0x8, scoped, tag = 'scoped memory for tpu_custom_call.1']
    #allocation5 [shape = 's32[2]{0}', space=sflag, size = 0x8, scoped, tag = 'scoped memory for tpu_custom_call.1']
    #allocation6 [shape = 'u8[65536]{0}', space=vmem, size = 0x10000, scoped, tag = 'output window, operand 0']
    %8 = vsyncpa [#allocation4], 0
    %s9 = scalar_lea.sflag [#allocation4], 1
    %10 = vsyncpa %s9, 0
    %11 = vsyncpa [#allocation5], 0
    %s12 = scalar_lea.sflag [#allocation5], 1
    %13 = vsyncpa %s12, 0
    loop: start=0, step=1, limit=18
    $region2: #{tpu_custom_call.1} parent=1 // loop_pre_header
      _
    $region3: #{tpu_custom_call.1} parent=1 // loop_header
      %s15 = sphi 0, %s19
      %p16 = scmp.ge.s32.totalorder %s15, 18
      %s22 = sphi 0, %s41
      %s23 = sphi 0, %s37
      %s24 = sphi 0, %s33
      %s25 = sphi 0, %s22
      %s26 = sphi 0, %s23
      %s27 = sphi 0, %s24
      %s28 = sphi 0, %s25
      %s29 = sphi 0, %s26
      %s30 = sphi 0, %s27
      %s46 = sphi 0, %s48
      %s49 = sphi 0, %s46
      %s50 = sphi 0, %s49
      %s66 = sphi 0, %s50
      %s74 = sphi 0, %s76
      %s77 = sphi 0, %s74
      %s78 = sphi 0, %s77
      %s94 = sphi 0, %s78
      %s100 = sphi 0, %s102
      %s103 = sphi 0, %s100
      %s104 = sphi 0, %s103
      %s120 = sphi 0, %s104
      %s128 = sphi 0, %s130
      %s131 = sphi 0, %s128
      %s132 = sphi 0, %s131
      %s148 = sphi 0, %s132
    $region4: #{tpu_custom_call.1} parent=1 // loop_header_branch
      %18 = sbr.rel (%p16) target = $region8
    $region5: #{tpu_custom_call.1} parent=1 // loop_body
      %s20 = ssub.s32 %s15, 1
      %s21 = ssub.s32 %s15, 2
      %s31 = sadd.s32 1, %s24
      %p32 = scmp.ge.s32.totalorder %s31, 1
      %s33 = scalar_select %p32, 0, %s31
      %s34 = sadd.s32 1, %s23
      %s35 = scalar_select %p32, %s34, %s23
      %p36 = scmp.ge.s32.totalorder %s35, 16
      %s37 = scalar_select %p36, 0, %s35
      %s38 = sadd.s32 1, %s22
      %s39 = scalar_select %p36, %s38, %s22
      %p40 = scmp.ge.s32.totalorder %s39, 1
      %s41 = scalar_select %p40, 0, %s39
      %s42 = ssub.s32 %s22, %s41
      %s43 = ssub.s32 %s24, %s33
      %s44 = sor.u32 %s42, %s43
      %p45 = scmp.eq.s32.totalorder %s44, 0
      %s47 = sadd.s32 %s46, 1
      %s48 = scalar_select %p45, %s46, %s47
      %p51 = pneg %p45
      %p52 = scmp.eq.s32.totalorder %s15, 15
      %p53 = por %p51, %p52
      %p54 = scmp.ne.s32.totalorder %s46, %s49
      %p55 = scmp.eq.s32.totalorder %s15, 0
      %p56 = por %p54, %p55
      %p57 = scmp.ne.s32.totalorder %s46, %s49
      %p58 = scmp.eq.s32.totalorder %s20, 15
      %p59 = por %p57, %p58
      %p60 = scmp.ne.s32.totalorder %s49, %s50
      %p61 = scmp.eq.s32.totalorder %s20, 0
      %p62 = por %p60, %p61
      %p63 = scmp.ne.s32.totalorder %s49, %s50
      %p64 = scmp.eq.s32.totalorder %s21, 15
      %p65 = por %p63, %p64
      %p67 = scmp.ne.s32.totalorder %s50, %s66
      %p68 = scmp.eq.s32.totalorder %s21, 0
      %p69 = por %p67, %p68
      %s70 = ssub.s32 %s24, %s33
      %s71 = ssub.s32 %s23, %s37
      %s72 = sor.u32 %s70, %s71
      %p73 = scmp.eq.s32.totalorder %s72, 0
      %s75 = sadd.s32 %s74, 1
      %s76 = scalar_select %p73, %s74, %s75
      %p79 = pneg %p73
      %p80 = scmp.eq.s32.totalorder %s15, 15
      %p81 = por %p79, %p80
      %p82 = scmp.ne.s32.totalorder %s74, %s77
      %p83 = scmp.eq.s32.totalorder %s15, 0
      %p84 = por %p82, %p83
      %p85 = scmp.ne.s32.totalorder %s74, %s77
      %p86 = scmp.eq.s32.totalorder %s20, 15
      %p87 = por %p85, %p86
      %p88 = scmp.ne.s32.totalorder %s77, %s78
      %p89 = scmp.eq.s32.totalorder %s20, 0
      %p90 = por %p88, %p89
      %p91 = scmp.ne.s32.totalorder %s77, %s78
      %p92 = scmp.eq.s32.totalorder %s21, 15
      %p93 = por %p91, %p92
      %p95 = scmp.ne.s32.totalorder %s78, %s94
      %p96 = scmp.eq.s32.totalorder %s21, 0
      %p97 = por %p95, %p96
      %s98 = ssub.s32 %s23, %s37
      %p99 = scmp.eq.s32.totalorder %s98, 0
      %s101 = sadd.s32 %s100, 1
      %s102 = scalar_select %p99, %s100, %s101
      %p105 = pneg %p99
      %p106 = scmp.eq.s32.totalorder %s15, 15
      %p107 = por %p105, %p106
      %p108 = scmp.ne.s32.totalorder %s100, %s103
      %p109 = scmp.eq.s32.totalorder %s15, 0
      %p110 = por %p108, %p109
      %p111 = scmp.ne.s32.totalorder %s100, %s103
      %p112 = scmp.eq.s32.totalorder %s20, 15
      %p113 = por %p111, %p112
      %p114 = scmp.ne.s32.totalorder %s103, %s104
      %p115 = scmp.eq.s32.totalorder %s20, 0
      %p116 = por %p114, %p115
      %p117 = scmp.ne.s32.totalorder %s103, %s104
      %p118 = scmp.eq.s32.totalorder %s21, 15
      %p119 = por %p117, %p118
      %p121 = scmp.ne.s32.totalorder %s104, %s120
      %p122 = scmp.eq.s32.totalorder %s21, 0
      %p123 = por %p121, %p122
      %s124 = ssub.s32 %s22, %s41
      %s125 = ssub.s32 %s23, %s37
      %s126 = sor.u32 %s124, %s125
      %p127 = scmp.eq.s32.totalorder %s126, 0
      %s129 = sadd.s32 %s128, 1
      %s130 = scalar_select %p127, %s128, %s129
      %p133 = pneg %p127
      %p134 = scmp.eq.s32.totalorder %s15, 15
      %p135 = por %p133, %p134
      %p136 = scmp.ne.s32.totalorder %s128, %s131
      %p137 = scmp.eq.s32.totalorder %s15, 0
      %p138 = por %p136, %p137
      %p139 = scmp.ne.s32.totalorder %s128, %s131
      %p140 = scmp.eq.s32.totalorder %s20, 15
      %p141 = por %p139, %p140
      %p142 = scmp.ne.s32.totalorder %s131, %s132
      %p143 = scmp.eq.s32.totalorder %s20, 0
      %p144 = por %p142, %p143
      %p145 = scmp.ne.s32.totalorder %s131, %s132
      %p146 = scmp.eq.s32.totalorder %s21, 15
      %p147 = por %p145, %p146
      %p149 = scmp.ne.s32.totalorder %s132, %s148
      %p150 = scmp.eq.s32.totalorder %s21, 0
      %p151 = por %p149, %p150
      %p152 = scmp.le.s32.totalorder 1, %s15
      %p153 = scmp.lt.s32.totalorder %s15, 17
      %p154 = pnand %p152, %p153
      %p155 = pneg %p154
      // Predicated region
      $region9: #{tpu_custom_call.1} parent=5 // pred_check
        _
      $region10: #{tpu_custom_call.1} parent=5 // pred_check_branch
        %157 = sbr.rel (%p154) target = $region12
      $region11: #{tpu_custom_call.1} parent=5 // pred_region
        %s158 = ssub.s32 %s15, 1
        // Predicated region
        $region13: #{tpu_custom_call.1} parent=11 // pred_check
          %p159 = pneg %p62
        $region14: #{tpu_custom_call.1} parent=11 // pred_check_branch
          %161 = sbr.rel (%p159) target = $region16
        $region15: #{tpu_custom_call.1} parent=11 // pred_region
          %s162 = smul.u32 16, %s25
          %p163 = scmp.lt.s32.totalorder %s162, 15
          %s164 = scalar_select %p163, %s162, 15
          %p165 = scmp.lt.s32.totalorder %s27, 0
          %s166 = scalar_select %p165, %s27, 0
          %s167 = sadd.s32 %s166, %s164
          %s168 = smul.addr %s167, 4
          %s169 = scalar_lea.vmem %s0, %s168
          %s170 = smul.u32 16, %s25
        $region16: #{tpu_custom_call.1} parent=11 // pred_fallthru
          _
      $region12: #{tpu_custom_call.1} parent=5 // pred_fallthru
        _
      %p171 = scmp.lt.s32.totalorder %s15, 16
      // Predicated region
      $region17: #{tpu_custom_call.1} parent=5 // pred_check
        %p172 = pneg %p171
      $region18: #{tpu_custom_call.1} parent=5 // pred_check_branch
        %174 = sbr.rel (%p172) target = $region20
      $region19: #{tpu_custom_call.1} parent=5 // pred_region
        // Predicated region
        $region21: #{tpu_custom_call.1} parent=19 // pred_check
          %p175 = pneg %p84
        $region22: #{tpu_custom_call.1} parent=19 // pred_check_branch
          %177 = sbr.rel (%p175) target = $region24
        $region23: #{tpu_custom_call.1} parent=19 // pred_region
          %s178 = sand.u32 %s74, 1
          %s179 = scalar_lea.sflag [#allocation4], %s178
          %s180 = sand.u32 %s74, 1
          %s181 = smul.addr %s180, 16
          %s182 = scalar_lea.vmem [#allocation3], %s181
          %s183 = smul.u32 4, %s24
          %185 = vsyncadd %s179, 0
          %s186 = smul.addr %s183, 16
          %s187 = sadd.s32 %s23, %s186
          %s188 = smul.addr %s187, 4
          %s189 = scalar_lea.hbm %s1, %s188
          %s190 = sshll.u32 %s189, 4
          %s191 = int_to_ptr.hbm [resolvable:$true] %s190
          %s192 = sshll.u32 %s182, 4
          %s193 = int_to_ptr.vmem [resolvable:$true] %s192
          %198 = dma.hbm_to_vmem [thread:$0]  %s191, 256, %s193, %s179, 1024, 64, 4
        $region24: #{tpu_custom_call.1} parent=19 // pred_fallthru
          _
        // Predicated region
        $region25: #{tpu_custom_call.1} parent=19 // pred_check
          %p199 = pneg %p110
        $region26: #{tpu_custom_call.1} parent=19 // pred_check_branch
          %201 = sbr.rel (%p199) target = $region28
        $region27: #{tpu_custom_call.1} parent=19 // pred_region
          %p202 = scmp.lt.s32.totalorder %s23, 15
          %s203 = scalar_select %p202, %s23, 15
          %s204 = scalar_lea.vmem %s2, %s203
        $region28: #{tpu_custom_call.1} parent=19 // pred_fallthru
          _
      $region20: #{tpu_custom_call.1} parent=5 // pred_fallthru
        _
      %p205 = scmp.le.s32.totalorder 1, %s15
      %p206 = scmp.lt.s32.totalorder %s15, 17
      %p207 = pnand %p205, %p206
      %p208 = pneg %p207
      // Predicated region
      $region29: #{tpu_custom_call.1} parent=5 // pred_check
        _
      $region30: #{tpu_custom_call.1} parent=5 // pred_check_branch
        %210 = sbr.rel (%p207) target = $region32
      $region31: #{tpu_custom_call.1} parent=5 // pred_region
        %s211 = ssub.s32 %s15, 1
        %s212 = sand.u32 %s77, 1
        %s213 = scalar_lea.sflag [#allocation4], %s212
        %s214 = sand.u32 %s77, 1
        %s215 = smul.addr %s214, 16
        %s216 = scalar_lea.vmem [#allocation3], %s215
        // Predicated region
        $region33: #{tpu_custom_call.1} parent=31 // pred_check
          %p217 = pneg %p90
        $region34: #{tpu_custom_call.1} parent=31 // pred_check_branch
          %219 = sbr.rel (%p217) target = $region36
        $region35: #{tpu_custom_call.1} parent=31 // pred_region
          %221 = dma.done %s213, 256
        $region36: #{tpu_custom_call.1} parent=31 // pred_fallthru
          _
        %s222 = smul.u32 16, %s25
        %p223 = scmp.lt.s32.totalorder %s222, 15
        %s224 = scalar_select %p223, %s222, 15
        %p225 = scmp.lt.s32.totalorder %s27, 0
        %s226 = scalar_select %p225, %s27, 0
        %s227 = sadd.s32 %s226, %s224
        %s228 = smul.addr %s227, 4
        %s229 = scalar_lea.vmem %s0, %s228
        %p230 = pneg %p62
        %p231 = pneg %p59
        %s232 = sand.u32 %s77, 1
        %s233 = scalar_lea.sflag [#allocation4], %s232
        %s234 = sand.u32 %s77, 1
        %s235 = smul.addr %s234, 16
        %s236 = scalar_lea.vmem [#allocation3], %s235
        %p237 = pneg %p90
        %p238 = pneg %p87
        %p239 = scmp.lt.s32.totalorder %s26, 15
        %s240 = scalar_select %p239, %s26, 15
        %s241 = scalar_lea.vmem %s2, %s240
        %p242 = pneg %p116
        %p243 = pneg %p113
        %p244 = pneg %p144
        %p245 = pneg %p141
        %s246 = sand.u32 %s131, 1
        %s247 = scalar_lea.sflag [#allocation5], %s246
        %s248 = sand.u32 %s131, 1
        %s249 = smul.addr %s248, 64
        %s250 = scalar_lea.vmem [#allocation6], %s249
        %s251 = smul.u32 16, %s25
        %p252 = scmp.lt.s32.totalorder %s251, 15
        %s253 = scalar_select %p252, %s251, 15
        %p254 = scmp.lt.s32.totalorder %s27, 0
        %s255 = scalar_select %p254, %s27, 0
        %s256 = sadd.s32 %s255, %s253
        %s257 = smul.addr %s256, 4
        %s258 = scalar_lea.vmem %s0, %s257
        %s259 = smul.u32 16, %s25
        %s260 = smul.u32 4, %s27
        %p261 = scmp.lt.s32.totalorder %s26, 15
        %s262 = scalar_select %p261, %s26, 15
        %s263 = scalar_lea.vmem %s2, %s262
        %s264 = smul.u32 16, %s25
        %p266 = scmp.eq.s32.totalorder %s27, 0
        // Predicated region
        $region37: #{tpu_custom_call.1} parent=31 // pred_check
          %p267 = pneg %p266
        $region38: #{tpu_custom_call.1} parent=31 // pred_check_branch
          %269 = sbr.rel (%p267) target = $region40
        $region39: #{tpu_custom_call.1} parent=31 // pred_region
          %270 = vst [vmem:[#allocation2] sm:$0xff] 0.0
          %271 = vst [vmem:[#allocation2 + $0x8] sm:$0xff] 0.0
          %272 = vst [vmem:[#allocation2 + $0x10] sm:$0xff] 0.0
          %273 = vst [vmem:[#allocation2 + $0x18] sm:$0xff] 0.0
          %274 = vst [vmem:[#allocation2 + $0x20] sm:$0xff] 0.0
          %275 = vst [vmem:[#allocation2 + $0x28] sm:$0xff] 0.0
          %276 = vst [vmem:[#allocation2 + $0x30] sm:$0xff] 0.0
          %277 = vst [vmem:[#allocation2 + $0x38] sm:$0xff] 0.0
          %278 = vst [vmem:[#allocation2 + $0x40] sm:$0xff] 0.0
          %279 = vst [vmem:[#allocation2 + $0x48] sm:$0xff] 0.0
          %280 = vst [vmem:[#allocation2 + $0x50] sm:$0xff] 0.0
          %281 = vst [vmem:[#allocation2 + $0x58] sm:$0xff] 0.0
          %282 = vst [vmem:[#allocation2 + $0x60] sm:$0xff] 0.0
          %283 = vst [vmem:[#allocation2 + $0x68] sm:$0xff] 0.0
          %284 = vst [vmem:[#allocation2 + $0x70] sm:$0xff] 0.0
          %285 = vst [vmem:[#allocation2 + $0x78] sm:$0xff] 0.0
        $region40: #{tpu_custom_call.1} parent=31 // pred_fallthru
          _
        %v286 = vld [vmem:[#allocation2] sm:$0xff]
        %v287 = vld [vmem:[#allocation2 + $0x8] sm:$0xff]
        %v288 = vld [vmem:[#allocation2 + $0x10] sm:$0xff]
        %v289 = vld [vmem:[#allocation2 + $0x18] sm:$0xff]
        %v290 = vld [vmem:[#allocation2 + $0x20] sm:$0xff]
        %v291 = vld [vmem:[#allocation2 + $0x28] sm:$0xff]
        %v292 = vld [vmem:[#allocation2 + $0x30] sm:$0xff]
        %v293 = vld [vmem:[#allocation2 + $0x38] sm:$0xff]
        %v294 = vld [vmem:[#allocation2 + $0x40] sm:$0xff]
        %v295 = vld [vmem:[#allocation2 + $0x48] sm:$0xff]
        %v296 = vld [vmem:[#allocation2 + $0x50] sm:$0xff]
        %v297 = vld [vmem:[#allocation2 + $0x58] sm:$0xff]
        %v298 = vld [vmem:[#allocation2 + $0x60] sm:$0xff]
        %v299 = vld [vmem:[#allocation2 + $0x68] sm:$0xff]
        %v300 = vld [vmem:[#allocation2 + $0x70] sm:$0xff]
        %v301 = vld [vmem:[#allocation2 + $0x78] sm:$0xff]
        %v302 = vld [vmem:[%s258] sm:$0xf]
        %v303 = vld [vmem:[%s258 + $0x4] sm:$0xf]
        %v304 = vld [vmem:[%s258 + $0x8] sm:$0xf]
        %v305 = vld [vmem:[%s258 + $0xc] sm:$0xf]
        %v306 = vld [vmem:[%s258 + $0x10] sm:$0xf]
        %v307 = vld [vmem:[%s258 + $0x14] sm:$0xf]
        %v308 = vld [vmem:[%s258 + $0x18] sm:$0xf]
        %v309 = vld [vmem:[%s258 + $0x1c] sm:$0xf]
        %v310 = vld [vmem:[%s258 + $0x20] sm:$0xf]
        %v311 = vld [vmem:[%s258 + $0x24] sm:$0xf]
        %v312 = vld [vmem:[%s258 + $0x28] sm:$0xf]
        %v313 = vld [vmem:[%s258 + $0x2c] sm:$0xf]
        %v314 = vld [vmem:[%s258 + $0x30] sm:$0xf]
        %v315 = vld [vmem:[%s258 + $0x34] sm:$0xf]
        %v316 = vld [vmem:[%s258 + $0x38] sm:$0xf]
        %v317 = vld [vmem:[%s258 + $0x3c] sm:$0xf]
        %v318 = vld [vmem:[%s216] sm:$0xf]
        %v319 = vld [vmem:[%s216 + $0x4] sm:$0xf]
        %v320 = vld [vmem:[%s216 + $0x8] sm:$0xf]
        %v321 = vld [vmem:[%s216 + $0xc] sm:$0xf]
        %v338 = vunpack.c.l.b16 %v302
        %v339 = vunpack.c.l.b16 %v303
        %v340 = vunpack.c.l.b16 %v304
        %v341 = vunpack.c.l.b16 %v305
        %v342 = vunpack.c.l.b16 %v306
        %v343 = vunpack.c.l.b16 %v307
        %v344 = vunpack.c.l.b16 %v308
        %v345 = vunpack.c.l.b16 %v309
        %v346 = vunpack.c.l.b16 %v310
        %v347 = vunpack.c.l.b16 %v311
        %v348 = vunpack.c.l.b16 %v312
        %v349 = vunpack.c.l.b16 %v313
        %v350 = vunpack.c.l.b16 %v314
        %v351 = vunpack.c.l.b16 %v315
        %v352 = vunpack.c.l.b16 %v316
        %v353 = vunpack.c.l.b16 %v317
        %v354 = vpack.c.b16 %v339, %v338
        %v355 = vpack.c.b16 %v341, %v340
        %v356 = vpack.c.b16 %v343, %v342
        %v357 = vpack.c.b16 %v345, %v344
        %v358 = vpack.c.b16 %v347, %v346
        %v359 = vpack.c.b16 %v349, %v348
        %v360 = vpack.c.b16 %v351, %v350
        %v361 = vpack.c.b16 %v353, %v352
        %v366 = vunpack.c.l.b16 %v318
        %v367 = vunpack.c.l.b16 %v319
        %v368 = vunpack.c.l.b16 %v320
        %v369 = vunpack.c.l.b16 %v321
        %v370 = vpack.c.b16 %v367, %v366
        %v371 = vpack.c.b16 %v369, %v368
        %vm374 = vcmask 261120
        %v376 = vsel %vm374, %v354, 0
        %v379 = vsel %vm374, %v355, 0
        %v382 = vsel %vm374, %v356, 0
        %v385 = vsel %vm374, %v357, 0
        %v388 = vsel %vm374, %v358, 0
        %v391 = vsel %vm374, %v359, 0
        %v394 = vsel %vm374, %v360, 0
        %v397 = vsel %vm374, %v361, 0
        %399 = vmatpush.bf16.msra.mxu0 0
        %400 = vmatpush.bf16.msra.mxu0 0
        %401 = vmatpush.bf16.msra.mxu0 0
        %402 = vmatpush.bf16.msra.mxu0 0
        %403 = vmatpush.bf16.msra.mxu0 0
        %404 = vmatpush.bf16.msra.mxu0 0
        %405 = vmatpush.bf16.msra.mxu0 %v371
        %406 = vmatpush.bf16.msra.mxu0 %v370
        %407 = vmatmul.bf16.gmra.mxu0 %v376
        %v408 = vpop.f32.mrf.mxu0
        %v409 = vadd.f32 0.0, %v408
        %v410 = vpop.f32.mrf.mxu0
        %v411 = vadd.f32 0.0, %v410
        %412 = vmatmul.bf16.gmra.mxu0 %v379
        %v413 = vpop.f32.mrf.mxu0
        %v414 = vadd.f32 0.0, %v413
        %v415 = vpop.f32.mrf.mxu0
        %v416 = vadd.f32 0.0, %v415
        %417 = vmatmul.bf16.gmra.mxu0 %v382
        %v418 = vpop.f32.mrf.mxu0
        %v419 = vadd.f32 0.0, %v418
        %v420 = vpop.f32.mrf.mxu0
        %v421 = vadd.f32 0.0, %v420
        %422 = vmatmul.bf16.gmra.mxu0 %v385
        %v423 = vpop.f32.mrf.mxu0
        %v424 = vadd.f32 0.0, %v423
        %v425 = vpop.f32.mrf.mxu0
        %v426 = vadd.f32 0.0, %v425
        %427 = vmatmul.bf16.gmra.mxu0 %v388
        %v428 = vpop.f32.mrf.mxu0
        %v429 = vadd.f32 0.0, %v428
        %v430 = vpop.f32.mrf.mxu0
        %v431 = vadd.f32 0.0, %v430
        %432 = vmatmul.bf16.gmra.mxu0 %v391
        %v433 = vpop.f32.mrf.mxu0
        %v434 = vadd.f32 0.0, %v433
        %v435 = vpop.f32.mrf.mxu0
        %v436 = vadd.f32 0.0, %v435
        %437 = vmatmul.bf16.gmra.mxu0 %v394
        %v438 = vpop.f32.mrf.mxu0
        %v439 = vadd.f32 0.0, %v438
        %v440 = vpop.f32.mrf.mxu0
        %v441 = vadd.f32 0.0, %v440
        %442 = vmatmul.bf16.gmra.mxu0 %v397
        %v443 = vpop.f32.mrf.mxu0
        %v444 = vadd.f32 0.0, %v443
        %v445 = vpop.f32.mrf.mxu0
        %v446 = vadd.f32 0.0, %v445
        %447 = vdwg.mxu0
        %v448 = vadd.f32 %v286, %v409
        %v449 = vadd.f32 %v287, %v411
        %v450 = vadd.f32 %v288, %v414
        %v451 = vadd.f32 %v289, %v416
        %v452 = vadd.f32 %v290, %v419
        %v453 = vadd.f32 %v291, %v421
        %v454 = vadd.f32 %v292, %v424
        %v455 = vadd.f32 %v293, %v426
        %v456 = vadd.f32 %v294, %v429
        %v457 = vadd.f32 %v295, %v431
        %v458 = vadd.f32 %v296, %v434
        %v459 = vadd.f32 %v297, %v436
        %v460 = vadd.f32 %v298, %v439
        %v461 = vadd.f32 %v299, %v441
        %v462 = vadd.f32 %v300, %v444
        %v463 = vadd.f32 %v301, %v446
        %464 = vst [vmem:[#allocation2] sm:$0xff] %v448
        %465 = vst [vmem:[#allocation2 + $0x8] sm:$0xff] %v449
        %466 = vst [vmem:[#allocation2 + $0x10] sm:$0xff] %v450
        %467 = vst [vmem:[#allocation2 + $0x18] sm:$0xff] %v451
        %468 = vst [vmem:[#allocation2 + $0x20] sm:$0xff] %v452
        %469 = vst [vmem:[#allocation2 + $0x28] sm:$0xff] %v453
        %470 = vst [vmem:[#allocation2 + $0x30] sm:$0xff] %v454
        %471 = vst [vmem:[#allocation2 + $0x38] sm:$0xff] %v455
        %472 = vst [vmem:[#allocation2 + $0x40] sm:$0xff] %v456
        %473 = vst [vmem:[#allocation2 + $0x48] sm:$0xff] %v457
        %474 = vst [vmem:[#allocation2 + $0x50] sm:$0xff] %v458
        %475 = vst [vmem:[#allocation2 + $0x58] sm:$0xff] %v459
        %476 = vst [vmem:[#allocation2 + $0x60] sm:$0xff] %v460
        %477 = vst [vmem:[#allocation2 + $0x68] sm:$0xff] %v461
        %478 = vst [vmem:[#allocation2 + $0x70] sm:$0xff] %v462
        %479 = vst [vmem:[#allocation2 + $0x78] sm:$0xff] %v463
        // Predicated region
        $region41: #{tpu_custom_call.1} parent=31 // pred_check
          %p480 = pneg %p266
        $region42: #{tpu_custom_call.1} parent=31 // pred_check_branch
          %482 = sbr.rel (%p480) target = $region44
        $region43: #{tpu_custom_call.1} parent=31 // pred_region
          %v483 = vld [vmem:[#allocation2] sm:$0xff]
          %v484 = vld [vmem:[#allocation2 + $0x8] sm:$0xff]
          %v485 = vld [vmem:[#allocation2 + $0x10] sm:$0xff]
          %v486 = vld [vmem:[#allocation2 + $0x18] sm:$0xff]
          %v487 = vld [vmem:[#allocation2 + $0x20] sm:$0xff]
          %v488 = vld [vmem:[#allocation2 + $0x28] sm:$0xff]
          %v489 = vld [vmem:[#allocation2 + $0x30] sm:$0xff]
          %v490 = vld [vmem:[#allocation2 + $0x38] sm:$0xff]
          %v491 = vld [vmem:[#allocation2 + $0x40] sm:$0xff]
          %v492 = vld [vmem:[#allocation2 + $0x48] sm:$0xff]
          %v493 = vld [vmem:[#allocation2 + $0x50] sm:$0xff]
          %v494 = vld [vmem:[#allocation2 + $0x58] sm:$0xff]
          %v495 = vld [vmem:[#allocation2 + $0x60] sm:$0xff]
          %v496 = vld [vmem:[#allocation2 + $0x68] sm:$0xff]
          %v497 = vld [vmem:[#allocation2 + $0x70] sm:$0xff]
          %v498 = vld [vmem:[#allocation2 + $0x78] sm:$0xff]
          %v499 = vld [vmem:[%s263] sm:$0x1]
          %v501 = vperm.slane %v499, 0
          %v503 = vadd.f32 %v483, %v501
          %v504 = vadd.f32 %v484, %v501
          %v505 = vadd.f32 %v485, %v501
          %v506 = vadd.f32 %v486, %v501
          %v507 = vadd.f32 %v487, %v501
          %v508 = vadd.f32 %v488, %v501
          %v509 = vadd.f32 %v489, %v501
          %v510 = vadd.f32 %v490, %v501
          %v511 = vadd.f32 %v491, %v501
          %v512 = vadd.f32 %v492, %v501
          %v513 = vadd.f32 %v493, %v501
          %v514 = vadd.f32 %v494, %v501
          %v515 = vadd.f32 %v495, %v501
          %v516 = vadd.f32 %v496, %v501
          %v517 = vadd.f32 %v497, %v501
          %v518 = vadd.f32 %v498, %v501
          %v519 = vmax.f32 %v503, 0.0
          %v520 = vmax.f32 %v504, 0.0
          %v521 = vmax.f32 %v505, 0.0
          %v522 = vmax.f32 %v506, 0.0
          %v523 = vmax.f32 %v507, 0.0
          %v524 = vmax.f32 %v508, 0.0
          %v525 = vmax.f32 %v509, 0.0
          %v526 = vmax.f32 %v510, 0.0
          %v527 = vmax.f32 %v511, 0.0
          %v528 = vmax.f32 %v512, 0.0
          %v529 = vmax.f32 %v513, 0.0
          %v530 = vmax.f32 %v514, 0.0
          %v531 = vmax.f32 %v515, 0.0
          %v532 = vmax.f32 %v516, 0.0
          %v533 = vmax.f32 %v517, 0.0
          %v534 = vmax.f32 %v518, 0.0
          %v535 = vpack.c.bf16 %v519, %v519
          %v536 = vpack.c.bf16 %v520, %v520
          %v537 = vpack.c.bf16 %v521, %v521
          %v538 = vpack.c.bf16 %v522, %v522
          %v539 = vpack.c.bf16 %v523, %v523
          %v540 = vpack.c.bf16 %v524, %v524
          %v541 = vpack.c.bf16 %v525, %v525
          %v542 = vpack.c.bf16 %v526, %v526
          %v543 = vpack.c.bf16 %v527, %v527
          %v544 = vpack.c.bf16 %v528, %v528
          %v545 = vpack.c.bf16 %v529, %v529
          %v546 = vpack.c.bf16 %v530, %v530
          %v547 = vpack.c.bf16 %v531, %v531
          %v548 = vpack.c.bf16 %v532, %v532
          %v549 = vpack.c.bf16 %v533, %v533
          %v550 = vpack.c.bf16 %v534, %v534
          %551 = vst [vmem:[%s250] sm:$0xf] %v535
          %552 = vst [vmem:[%s250 + $0x4] sm:$0xf] %v536
          %553 = vst [vmem:[%s250 + $0x8] sm:$0xf] %v537
          %554 = vst [vmem:[%s250 + $0xc] sm:$0xf] %v538
          %555 = vst [vmem:[%s250 + $0x10] sm:$0xf] %v539
          %556 = vst [vmem:[%s250 + $0x14] sm:$0xf] %v540
          %557 = vst [vmem:[%s250 + $0x18] sm:$0xf] %v541
          %558 = vst [vmem:[%s250 + $0x1c] sm:$0xf] %v542
          %559 = vst [vmem:[%s250 + $0x20] sm:$0xf] %v543
          %560 = vst [vmem:[%s250 + $0x24] sm:$0xf] %v544
          %561 = vst [vmem:[%s250 + $0x28] sm:$0xf] %v545
          %562 = vst [vmem:[%s250 + $0x2c] sm:$0xf] %v546
          %563 = vst [vmem:[%s250 + $0x30] sm:$0xf] %v547
          %564 = vst [vmem:[%s250 + $0x34] sm:$0xf] %v548
          %565 = vst [vmem:[%s250 + $0x38] sm:$0xf] %v549
          %566 = vst [vmem:[%s250 + $0x3c] sm:$0xf] %v550
        $region44: #{tpu_custom_call.1} parent=31 // pred_fallthru
          _
        %s567 = sand.u32 %s131, 1
        %s568 = scalar_lea.sflag [#allocation5], %s567
        %s569 = sand.u32 %s131, 1
        %s570 = smul.addr %s569, 64
        %s571 = scalar_lea.vmem [#allocation6], %s570
        // Predicated region
        $region45: #{tpu_custom_call.1} parent=31 // pred_check
          %p572 = pneg %p141
        $region46: #{tpu_custom_call.1} parent=31 // pred_check_branch
          %574 = sbr.rel (%p572) target = $region48
        $region47: #{tpu_custom_call.1} parent=31 // pred_region
          %s575 = smul.u32 16, %s25
          %577 = vsyncadd %s568, 0
          %s578 = smul.addr %s575, 16
          %s579 = sadd.s32 %s26, %s578
          %s580 = smul.addr %s579, 4
          %s581 = scalar_lea.hbm %s3, %s580
          %s582 = sshll.u32 %s571, 4
          %s583 = int_to_ptr.vmem [resolvable:$true] %s582
          %s584 = sshll.u32 %s581, 4
          %s585 = int_to_ptr.hbm [resolvable:$true] %s584
          %590 = dma.vmem_to_hbm [thread:$0]  %s583, 1024, %s585, %s568, 64, 1024, 4
        $region48: #{tpu_custom_call.1} parent=31 // pred_fallthru
          _
      $region32: #{tpu_custom_call.1} parent=5 // pred_fallthru
        _
      %p591 = scmp.le.s32.totalorder 2, %s15
      // Predicated region
      $region49: #{tpu_custom_call.1} parent=5 // pred_check
        %p592 = pneg %p591
      $region50: #{tpu_custom_call.1} parent=5 // pred_check_branch
        %594 = sbr.rel (%p592) target = $region52
      $region51: #{tpu_custom_call.1} parent=5 // pred_region
        %s595 = ssub.s32 %s15, 2
        // Predicated region
        $region53: #{tpu_custom_call.1} parent=51 // pred_check
          %p596 = pneg %p147
        $region54: #{tpu_custom_call.1} parent=51 // pred_check_branch
          %598 = sbr.rel (%p596) target = $region56
        $region55: #{tpu_custom_call.1} parent=51 // pred_region
          %s599 = sand.u32 %s132, 1
          %s600 = scalar_lea.sflag [#allocation5], %s599
          %s601 = sand.u32 %s132, 1
          %s602 = smul.addr %s601, 64
          %s603 = scalar_lea.vmem [#allocation6], %s602
          %605 = dma.done %s600, 1024
        $region56: #{tpu_custom_call.1} parent=51 // pred_fallthru
          _
      $region52: #{tpu_custom_call.1} parent=5 // pred_fallthru
        _
    $region6: #{tpu_custom_call.1} parent=1 // loop_footer
      %s19 = sadd.s32 1, %s15
    $region7: #{tpu_custom_call.1} parent=1 // loop_footer_branch
      %14 = sbr.rel target = $region3
    $region8: #{tpu_custom_call.1} parent=1 // loop_exit
      _
    %606 = vsyncpa [#allocation4], 1
    %s607 = scalar_lea.sflag [#allocation4], 1
    %608 = vsyncpa %s607, 1
    %609 = vsyncpa [#allocation5], 1
    %s610 = scalar_lea.sflag [#allocation5], 1
    %611 = vsyncpa %s610, 1

</llo_original>
